<compile_context>
chip_gen: v7x
topology: tpu7x:2x2x1
jax: 0.10.0
libtpu: 0.0.40
codegen_flags: <defaults>
</compile_context>

<pallas_src>
from functools import partial

import jax
import jax.numpy as jnp
from jax import lax
from jax.experimental import pallas as pl
from jax.experimental.pallas import tpu as pltpu

_LANES = 128
_HIGHEST = lax.Precision.HIGHEST


def _round_up(v, m):
    return ((v + m - 1) // m) * m


def _vmem_capacity_bytes():
    """Physical per-core VMEM (128 MiB v5e/v6e, 64 MiB v7x); safe fallback."""
    try:
        return int(pltpu.get_tpu_info().vmem_capacity_bytes)
    except Exception:
        return 64 * 1024 * 1024


def _bf16_channel_threshold():
    """Channel count above which attention @ x is compute-bound and bf16 MXU
    operands pay for themselves (per-generation roofline crossover)."""
    try:
        kind = jax.devices()[0].device_kind.lower()
    except Exception:
        kind = ""
    if "v5" in kind:
        return 128
    if "v7" in kind:
        return 512
    return 256  # v6e / unknown


# ---------------------------------------------------------------------------
# Fused single-pass kernel: whole (NB, C, HWp) slab resident per grid step.
# ---------------------------------------------------------------------------
def _channel_attention_kernel(gamma_ref, x_ref, o_ref, *, use_bf16_mxu):
    x = x_ref[...]                                     # (NB, C, HWp), native dtype

    # energy[b] = x[b] @ x[b]^T via transposed contraction (no XLU transpose).
    # HIGHEST precision: energy feeds an exponential, default-precision error
    # (~|E| * 2^-8) would destroy parity with the f32 reference.
    energy = lax.dot_general(
        x, x,
        dimension_numbers=(((2,), (2,)), ((0,), (0,))),
        preferred_element_type=jnp.float32,
        precision=_HIGHEST if x.dtype == jnp.float32 else None,
    )                                                  # (NB, C, C) f32

    # softmax(rowmax(E) - E) == softmax(-E); stable fused shift uses rowmin(E),
    # saving one (C, C) reduction + one full (C, C) VPU pass.
    e_min = jnp.min(energy, axis=-1, keepdims=True)
    p = jnp.exp(e_min - energy)
    denom = jnp.sum(p, axis=-1, keepdims=True)
    attention = p * (1.0 / denom)                      # exact reciprocal

    # bf16 operands only on attention @ x (attention is in [0, 1] -> safe).
    mm_dtype = jnp.bfloat16 if (use_bf16_mxu or x.dtype == jnp.bfloat16) else x.dtype
    attn_op = attention.astype(mm_dtype)
    x_op = x if x.dtype == mm_dtype else x.astype(mm_dtype)
    out = lax.dot_general(
        attn_op, x_op,
        dimension_numbers=(((2,), (1,)), ((0,), (0,))),
        preferred_element_type=jnp.float32,
        precision=_HIGHEST if mm_dtype == jnp.float32 else None,
    )                                                  # (NB, C, HWp) f32

    gamma = gamma_ref[0]
    o_ref[...] = (gamma * out + x.astype(jnp.float32)).astype(o_ref.dtype)


# ---------------------------------------------------------------------------
# HW-tiled two-pass path (large C*HW working sets).
# ---------------------------------------------------------------------------
def _energy_softmax_kernel(x_ref, attn_ref, acc_ref):
    # x_ref: (1, C, THW)   attn_ref: (1, C, C)   acc_ref: VMEM (C, C) f32
    h = pl.program_id(1)

    @pl.when(h == 0)
    def _():
        acc_ref[...] = jnp.zeros_like(acc_ref)

    x = x_ref[0]                                       # (C, THW)
    acc_ref[...] += lax.dot_general(
        x, x,
        dimension_numbers=(((1,), (1,)), ((), ())),
        preferred_element_type=jnp.float32,
        precision=_HIGHEST if x.dtype == jnp.float32 else None,
    )

    @pl.when(h == pl.num_programs(1) - 1)
    def _():
        e = acc_ref[...]
        e_min = jnp.min(e, axis=-1, keepdims=True)
        p = jnp.exp(e_min - e)
        denom = jnp.sum(p, axis=-1, keepdims=True)
        attn_ref[0] = (p * (1.0 / denom)).astype(attn_ref.dtype)


def _apply_attention_kernel(gamma_ref, attn_ref, x_ref, o_ref, *, use_bf16_mxu):
    x = x_ref[0]                                       # (C, THW)
    attention = attn_ref[0]                            # (C, C) f32
    mm_dtype = jnp.bfloat16 if (use_bf16_mxu or x.dtype == jnp.bfloat16) else x.dtype
    attn_op = attention.astype(mm_dtype)
    x_op = x if x.dtype == mm_dtype else x.astype(mm_dtype)
    out = lax.dot_general(
        attn_op, x_op,
        dimension_numbers=(((1,), (0,)), ((), ())),
        preferred_element_type=jnp.float32,
        precision=_HIGHEST if mm_dtype == jnp.float32 else None,
    )                                                  # (C, THW) f32
    gamma = gamma_ref[0]
    o_ref[0] = (gamma * out + x.astype(jnp.float32)).astype(o_ref.dtype)


# ---------------------------------------------------------------------------
# Wrapper
# ---------------------------------------------------------------------------
def channel_attention(x, gamma, *, hw_tile=None, vmem_budget_bytes=None):
    """x: (N, C, H, W), gamma: (1,) -> (N, C, H, W). Matches the PyTorch module.

    hw_tile: force the HW-tiled two-pass path with this tile size (testing /
    manual override); None = automatic dispatch based on the VMEM budget.
    """
    N, C, H, W = x.shape
    HW = H * W
    in_bytes = jnp.dtype(x.dtype).itemsize
    gamma = jnp.asarray(gamma, jnp.float32).reshape((1,))

    cap = _vmem_capacity_bytes()
    budget = int(vmem_budget_bytes) if vmem_budget_bytes is not None else int(cap * 0.7)
    use_bf16_mxu = C >= _bf16_channel_threshold()
    needs_bf16_copy = use_bf16_mxu or x.dtype == jnp.bfloat16

    def single_pass_bytes_per_batch(hwp_):
        b = 4 * C * hwp_ * in_bytes          # double-buffered in + out slabs
        b += 3 * C * C * 4                   # energy / p / attention f32 temps
        b += C * hwp_ * 4                    # f32 matmul result before the store
        if needs_bf16_copy:
            b += C * hwp_ * 2 + C * C * 2    # bf16 operand copies
        return b

    hwp = _round_up(HW, _LANES)              # lane-dense stores
    use_tiled = (hw_tile is not None) or (single_pass_bytes_per_batch(hwp) > budget)

    x_flat = x.reshape(N, C, HW)

    if not use_tiled:
        per_b = single_pass_bytes_per_batch(hwp)
        # Keep >= ~4 grid steps when N allows (megacore sharding + pipelining);
        # cdiv grid means NB need not divide N.
        nb = max(1, min(budget // per_b, pl.cdiv(N, 4), N))
        grid_n = pl.cdiv(N, nb)

        if hwp != HW:
            x_flat = jnp.pad(x_flat, ((0, 0), (0, 0), (0, hwp - HW)))

        vmem_limit = int(min(cap * 0.9,
                             max(nb * per_b * 1.25 + (4 << 20), 32 << 20)))
        cost = pl.CostEstimate(
            flops=4 * N * C * C * hwp,
            transcendentals=N * C * C,
            bytes_accessed=2 * N * C * hwp * in_bytes,
        )
        out_flat = pl.pallas_call(
            partial(_channel_attention_kernel, use_bf16_mxu=use_bf16_mxu),
            out_shape=jax.ShapeDtypeStruct((N, C, hwp), x.dtype),
            grid=(grid_n,),
            in_specs=[
                pl.BlockSpec(memory_space=pltpu.MemorySpace.SMEM),   # gamma
                pl.BlockSpec((nb, C, hwp), lambda n: (n, 0, 0)),     # x slab
            ],
            out_specs=pl.BlockSpec((nb, C, hwp), lambda n: (n, 0, 0)),
            compiler_params=pltpu.CompilerParams(
                dimension_semantics=("parallel",),
                vmem_limit_bytes=vmem_limit,
            ),
            cost_estimate=cost,
        )(gamma, x_flat)
    else:
        # ---- HW-tiled two-pass pipeline ----
        fixed = 6 * C * C * 4                 # acc scratch + softmax temps + attn block
        per_unit = 4 * C * _LANES * in_bytes + C * _LANES * 4
        if needs_bf16_copy:
            per_unit += C * _LANES * 2
        units = max(1, (budget - fixed) // per_unit)
        thw = int(min(units, pl.cdiv(HW, _LANES))) * _LANES
        if hw_tile is not None:
            thw = min(thw, _round_up(int(hw_tile), _LANES))
        thw = max(thw, _LANES)
        hwp = _round_up(HW, thw)              # zero padding is exact for the Gram matrix
        n_hw = hwp // thw

        if hwp != HW:
            x_flat = jnp.pad(x_flat, ((0, 0), (0, 0), (0, hwp - HW)))

        vmem_limit = int(min(cap * 0.9,
                             max((fixed + per_unit * (thw // _LANES)) * 1.25 + (4 << 20),
                                 32 << 20)))

        # Pass 1: accumulate energy over HW tiles, softmax on the last tile.
        attention = pl.pallas_call(
            _energy_softmax_kernel,
            out_shape=jax.ShapeDtypeStruct((N, C, C), jnp.float32),
            grid=(N, n_hw),
            in_specs=[pl.BlockSpec((1, C, thw), lambda n, h: (n, 0, h))],
            out_specs=pl.BlockSpec((1, C, C), lambda n, h: (n, 0, 0)),
            scratch_shapes=[pltpu.VMEM((C, C), jnp.float32)],
            compiler_params=pltpu.CompilerParams(
                dimension_semantics=("parallel", "arbitrary"),
                vmem_limit_bytes=vmem_limit,
            ),
            cost_estimate=pl.CostEstimate(
                flops=2 * N * C * C * hwp,
                transcendentals=N * C * C,
                bytes_accessed=N * C * hwp * in_bytes + N * C * C * 4,
            ),
        )(x_flat)

        # Pass 2: stream x tiles again, out = gamma * (attention @ x) + x.
        out_flat = pl.pallas_call(
            partial(_apply_attention_kernel, use_bf16_mxu=use_bf16_mxu),
            out_shape=jax.ShapeDtypeStruct((N, C, hwp), x.dtype),
            grid=(N, n_hw),
            in_specs=[
                pl.BlockSpec(memory_space=pltpu.MemorySpace.SMEM),      # gamma
                pl.BlockSpec((1, C, C), lambda n, h: (n, 0, 0)),        # attention
                pl.BlockSpec((1, C, thw), lambda n, h: (n, 0, h)),      # x tile
            ],
            out_specs=pl.BlockSpec((1, C, thw), lambda n, h: (n, 0, h)),
            compiler_params=pltpu.CompilerParams(
                dimension_semantics=("parallel", "parallel"),
                vmem_limit_bytes=vmem_limit,
            ),
            cost_estimate=pl.CostEstimate(
                flops=2 * N * C * C * hwp,
                transcendentals=0,
                bytes_accessed=2 * N * C * hwp * in_bytes + N * C * C * 4,
            ),
        )(gamma, attention, x_flat)

    out = out_flat[:, :, :HW] if hwp != HW else out_flat
    return out.reshape(N, C, H, W)


def channel_attention_ref(x, gamma):
    """Pure-JAX reference mirroring the PyTorch forward (true f32 matmuls)."""
    N, C, H, W = x.shape
    q = x.reshape(N, C, -1).astype(jnp.float32)
    energy = jnp.einsum("ncl,nkl->nck", q, q, precision=_HIGHEST)
    energy = jnp.max(energy, axis=-1, keepdims=True) - energy
    attention = jax.nn.softmax(energy, axis=-1)
    out = jnp.einsum("nck,nkl->ncl", attention, q, precision=_HIGHEST)
    out = out.reshape(N, C, H, W)
    return (gamma[0] * out + x.astype(jnp.float32)).astype(x.dtype)


if __name__ == "__main__":
    key = jax.random.PRNGKey(0)
    N, C, H, W = 2, 4, 16, 16
    x = jax.random.normal(key, (N, C, H, W), dtype=jnp.float32)

    # Parameter from the module __init__: gamma = zeros(1) -> output == x.
    gamma0 = jnp.zeros((1,), dtype=jnp.float32)
    out0 = jax.block_until_ready(channel_attention(x, gamma0))
    assert out0.shape == (N, C, H, W)
    assert jnp.allclose(out0, channel_attention_ref(x, gamma0), atol=1e-5, rtol=1e-5)

    # Non-trivial gamma exercises the attention path (fused single-pass kernel).
    gamma1 = jnp.array([0.5], dtype=jnp.float32)
    out1 = jax.block_until_ready(channel_attention(x, gamma1))
    ref1 = channel_attention_ref(x, gamma1)
    assert jnp.allclose(out1, ref1, atol=2e-3, rtol=2e-3)

    # Force the HW-tiled two-pass path (used for large C*HW) on the small shape
    # so that code path is validated too (2 HW tiles of 128 each).
    out2 = jax.block_until_ready(channel_attention(x, gamma1, hw_tile=128))
    assert jnp.allclose(out2, ref1, atol=2e-3, rtol=2e-3)

    print("KERNEL_OK")
</pallas_src>

<mosaic_0001>
module attributes {stable_mosaic.version = 11 : i64} {
  func.func @_channel_attention_kernel(%arg0: i32, %arg1: memref<1xf32, #tpu.memory_space<smem>>, %arg2: memref<1x4x256xf32, #tpu.memory_space<vmem>>, %arg3: memref<1x4x256xf32, #tpu.memory_space<vmem>>) attributes {dimension_semantics = [#tpu.dimension_semantics<parallel>], iteration_bounds = array<i64: 2>, scalar_prefetch = 0 : i64, scratch_operands = 0 : i64, tpu.core_type = #tpu.core_type<tc>, window_params = [{transform_indices = @transform_0, window_bounds = array<i64: 1>}, {transform_indices = @transform_1, window_bounds = array<i64: 1, 4, 256>}, {transform_indices = @transform_2, window_bounds = array<i64: 1, 4, 256>}]} {
    %c0 = arith.constant 0 : index
    %c0_0 = arith.constant 0 : index
    %c0_1 = arith.constant 0 : index
    %0 = vector.load %arg2[%c0, %c0_0, %c0_1] : memref<1x4x256xf32, #tpu.memory_space<vmem>>, vector<1x4x256xf32>
    %cst = arith.constant dense<0.000000e+00> : vector<1x4x4xf32>
    %1 = tpu.matmul %0, %0, %cst {dimension_numbers = #tpu.dot_dimension_numbers<[2], [2], [1], [1], [0, 0, 0, 1, 1, 1], [0], [0]>, precision = #tpu.contract_precision<fp32>} : vector<1x4x256xf32>, vector<1x4x256xf32>, vector<1x4x4xf32> -> vector<1x4x4xf32>
    %cst_2 = arith.constant dense<0x7F800000> : vector<1x4xf32>
    %2 = vector.multi_reduction <minimumf>, %1, %cst_2 [2] : vector<1x4x4xf32> to vector<1x4xf32>
    %3 = vector.shape_cast %2 : vector<1x4xf32> to vector<1x4x1xf32>
    %4 = vector.broadcast %3 : vector<1x4x1xf32> to vector<1x4x4xf32>
    %5 = arith.subf %4, %1 : vector<1x4x4xf32>
    %6 = math.exp %5 : vector<1x4x4xf32>
    %cst_3 = arith.constant dense<0.000000e+00> : vector<1x4xf32>
    %7 = vector.multi_reduction <add>, %6, %cst_3 [2] : vector<1x4x4xf32> to vector<1x4xf32>
    %8 = vector.shape_cast %7 : vector<1x4xf32> to vector<1x4x1xf32>
    %cst_4 = arith.constant 1.000000e+00 : f32
    %9 = vector.broadcast %cst_4 : f32 to vector<1x4x1xf32>
    %10 = arith.divf %9, %8 : vector<1x4x1xf32>
    %11 = vector.broadcast %10 : vector<1x4x1xf32> to vector<1x4x4xf32>
    %12 = arith.mulf %6, %11 : vector<1x4x4xf32>
    %cst_5 = arith.constant dense<0.000000e+00> : vector<1x4x256xf32>
    %13 = tpu.matmul %12, %0, %cst_5 {dimension_numbers = #tpu.dot_dimension_numbers<[2], [1], [1], [2], [0, 0, 0, 1, 1, 2], [0], [0]>, precision = #tpu.contract_precision<fp32>} : vector<1x4x4xf32>, vector<1x4x256xf32>, vector<1x4x256xf32> -> vector<1x4x256xf32>
    %c0_6 = arith.constant 0 : index
    %14 = memref.load %arg1[%c0_6] : memref<1xf32, #tpu.memory_space<smem>>
    %15 = vector.broadcast %14 : f32 to vector<1x4x256xf32>
    %16 = arith.mulf %15, %13 : vector<1x4x256xf32>
    %17 = arith.addf %16, %0 : vector<1x4x256xf32>
    %c0_7 = arith.constant 0 : index
    %c0_8 = arith.constant 0 : index
    %c0_9 = arith.constant 0 : index
    %18 = vector.load %arg3[%c0_7, %c0_8, %c0_9] : memref<1x4x256xf32, #tpu.memory_space<vmem>>, vector<1x4x256xf32>
    tpu.vector_store %arg3[%c0_7, %c0_8, %c0_9], %17 {strides = array<i32>} : memref<1x4x256xf32, #tpu.memory_space<vmem>>, vector<1x4x256xf32>,
    return
  }
  func.func @transform_0(%arg0: i32) -> i32 {
    %c0_i32 = arith.constant 0 : i32
    %c0_i32_0 = arith.constant 0 : i32
    return %c0_i32 : i32
  }
  func.func @transform_1(%arg0: i32) -> (i32, i32, i32) {
    %c0_i32 = arith.constant 0 : i32
    %c0_i32_0 = arith.constant 0 : i32
    %c0_i32_1 = arith.constant 0 : i32
    return %arg0, %c0_i32, %c0_i32_0 : i32, i32, i32
  }
  func.func @transform_2(%arg0: i32) -> (i32, i32, i32) {
    %c0_i32 = arith.constant 0 : i32
    %c0_i32_0 = arith.constant 0 : i32
    %c0_i32_1 = arith.constant 0 : i32
    return %arg0, %c0_i32, %c0_i32_0 : i32, i32, i32
  }
}

</mosaic_0001>

<llo_original>
// kernel: tpu_custom_call.1
$region0: #{tpu_custom_call.1}
  #allocation0 [shape = 'u32[]', space=smem, size = 0x4, offset = 0x4, fixed_abs, tag = 'smem constant byte address 0x4 - core index']
  #allocation1 [shape = 'u32[144,128]{1,0:T(1,128)}', space=vmem, size = 0x12000, scoped, tag = 'internal scratch']
  #allocation2 [shape = 'f32[1]{0:T(128)S(6)}', space=smem, size = 0x200, scoped, tag = 'scoped memory for tpu_custom_call.1']
  %s0 = inlined_call_operand.<no memory space> [shape: f32[1], index: 0, kind: input, shape index: {}]
  %s1 = inlined_call_operand.hbm [shape: f32[2,4,256], index: 1, kind: input, shape index: {}]
  %s2 = inlined_call_operand.hbm [shape: f32[2,4,256], index: 2, kind: output, shape index: {}]
  %s3 = sld [smem:[#allocation0]]
  $region45: #{tpu_custom_call.1} parent=0
    _
  %s5 = ssub.s32 1, %s3
  %s6 = scalar_select 0, %s5, %s3
  %7 = sst [smem:[#allocation2]] %s0
  $region1: #{tpu_custom_call.1} parent=0
    #allocation3 [shape = 'u8[8192]{0}', space=vmem, size = 0x2000, scoped, tag = 'input window, operand 1']
    #allocation4 [shape = 's32[2]{0}', space=sflag, size = 0x8, scoped, tag = 'scoped memory for tpu_custom_call.1']
    #allocation5 [shape = 's32[2]{0}', space=sflag, size = 0x8, scoped, tag = 'scoped memory for tpu_custom_call.1']
    #allocation6 [shape = 'u8[8192]{0}', space=vmem, size = 0x2000, scoped, tag = 'output window, operand 0']
    %8 = vsyncpa [#allocation4], 0
    %s9 = scalar_lea.sflag [#allocation4], 1
    %10 = vsyncpa %s9, 0
    %11 = vsyncpa [#allocation5], 0
    %s12 = scalar_lea.sflag [#allocation5], 1
    %13 = vsyncpa %s12, 0
    loop: start=0, step=1, limit=4
    $region2: #{tpu_custom_call.1} parent=1 // loop_pre_header
      _
    $region3: #{tpu_custom_call.1} parent=1 // loop_header
      %s15 = sphi 0, %s19
      %p16 = scmp.ge.s32.totalorder %s15, 4
      %s23 = sphi 0, %s23
      %s25 = sphi 0, %s23
      %s26 = sphi 0, %s25
      %s40 = sphi 0, %s26
      %s46 = sphi 0, %s48
      %s49 = sphi 0, %s46
      %s50 = sphi 0, %s49
      %s66 = sphi 0, %s50
      %s72 = sphi 0, %s74
      %s75 = sphi 0, %s72
      %s76 = sphi 0, %s75
      %s92 = sphi 0, %s76
    $region4: #{tpu_custom_call.1} parent=1 // loop_header_branch
      %18 = sbr.rel (%p16) target = $region8
    $region5: #{tpu_custom_call.1} parent=1 // loop_body
      %s20 = ssub.s32 %s15, 1
      %s21 = ssub.s32 %s15, 2
      %s22 = sadd.s32 %s15, 1
      %s24 = sadd.s32 %s23, 1
      %p27 = scmp.eq.s32.totalorder %s15, 1
      %p28 = scmp.ne.s32.totalorder %s23, %s25
      %p29 = scmp.eq.s32.totalorder %s15, 0
      %p30 = por %p28, %p29
      %p31 = scmp.ne.s32.totalorder %s23, %s25
      %p32 = scmp.eq.s32.totalorder %s20, 1
      %p33 = por %p31, %p32
      %p34 = scmp.ne.s32.totalorder %s25, %s26
      %p35 = scmp.eq.s32.totalorder %s20, 0
      %p36 = por %p34, %p35
      %p37 = scmp.ne.s32.totalorder %s25, %s26
      %p38 = scmp.eq.s32.totalorder %s21, 1
      %p39 = por %p37, %p38
      %p41 = scmp.ne.s32.totalorder %s26, %s40
      %p42 = scmp.eq.s32.totalorder %s21, 0
      %p43 = por %p41, %p42
      %s44 = ssub.s32 %s15, %s22
      %p45 = scmp.eq.s32.totalorder %s44, 0
      %s47 = sadd.s32 %s46, 1
      %s48 = scalar_select %p45, %s46, %s47
      %p51 = pneg %p45
      %p52 = scmp.eq.s32.totalorder %s15, 1
      %p53 = por %p51, %p52
      %p54 = scmp.ne.s32.totalorder %s46, %s49
      %p55 = scmp.eq.s32.totalorder %s15, 0
      %p56 = por %p54, %p55
      %p57 = scmp.ne.s32.totalorder %s46, %s49
      %p58 = scmp.eq.s32.totalorder %s20, 1
      %p59 = por %p57, %p58
      %p60 = scmp.ne.s32.totalorder %s49, %s50
      %p61 = scmp.eq.s32.totalorder %s20, 0
      %p62 = por %p60, %p61
      %p63 = scmp.ne.s32.totalorder %s49, %s50
      %p64 = scmp.eq.s32.totalorder %s21, 1
      %p65 = por %p63, %p64
      %p67 = scmp.ne.s32.totalorder %s50, %s66
      %p68 = scmp.eq.s32.totalorder %s21, 0
      %p69 = por %p67, %p68
      %s70 = ssub.s32 %s15, %s22
      %p71 = scmp.eq.s32.totalorder %s70, 0
      %s73 = sadd.s32 %s72, 1
      %s74 = scalar_select %p71, %s72, %s73
      %p77 = pneg %p71
      %p78 = scmp.eq.s32.totalorder %s15, 1
      %p79 = por %p77, %p78
      %p80 = scmp.ne.s32.totalorder %s72, %s75
      %p81 = scmp.eq.s32.totalorder %s15, 0
      %p82 = por %p80, %p81
      %p83 = scmp.ne.s32.totalorder %s72, %s75
      %p84 = scmp.eq.s32.totalorder %s20, 1
      %p85 = por %p83, %p84
      %p86 = scmp.ne.s32.totalorder %s75, %s76
      %p87 = scmp.eq.s32.totalorder %s20, 0
      %p88 = por %p86, %p87
      %p89 = scmp.ne.s32.totalorder %s75, %s76
      %p90 = scmp.eq.s32.totalorder %s21, 1
      %p91 = por %p89, %p90
      %p93 = scmp.ne.s32.totalorder %s76, %s92
      %p94 = scmp.eq.s32.totalorder %s21, 0
      %p95 = por %p93, %p94
      %p96 = scmp.le.s32.totalorder 1, %s15
      %p97 = scmp.lt.s32.totalorder %s15, 3
      %p98 = pnand %p96, %p97
      %p99 = pneg %p98
      // Predicated region
      $region9: #{tpu_custom_call.1} parent=5 // pred_check
        _
      $region10: #{tpu_custom_call.1} parent=5 // pred_check_branch
        %101 = sbr.rel (%p98) target = $region12
      $region11: #{tpu_custom_call.1} parent=5 // pred_region
        %s102 = ssub.s32 %s15, 1
        // Predicated region
        $region13: #{tpu_custom_call.1} parent=11 // pred_check
          %p103 = pneg %p36
        $region14: #{tpu_custom_call.1} parent=11 // pred_check_branch
          %105 = sbr.rel (%p103) target = $region16
        $region15: #{tpu_custom_call.1} parent=11 // pred_region
          _
        $region16: #{tpu_custom_call.1} parent=11 // pred_fallthru
          _
      $region12: #{tpu_custom_call.1} parent=5 // pred_fallthru
        _
      %p106 = scmp.lt.s32.totalorder %s15, 2
      // Predicated region
      $region17: #{tpu_custom_call.1} parent=5 // pred_check
        %p107 = pneg %p106
      $region18: #{tpu_custom_call.1} parent=5 // pred_check_branch
        %109 = sbr.rel (%p107) target = $region20
      $region19: #{tpu_custom_call.1} parent=5 // pred_region
        // Predicated region
        $region21: #{tpu_custom_call.1} parent=19 // pred_check
          %p110 = pneg %p56
        $region22: #{tpu_custom_call.1} parent=19 // pred_check_branch
          %112 = sbr.rel (%p110) target = $region24
        $region23: #{tpu_custom_call.1} parent=19 // pred_region
          %s113 = sand.u32 %s46, 1
          %s114 = scalar_lea.sflag [#allocation4], %s113
          %s115 = sand.u32 %s46, 1
          %s116 = smul.addr %s115, 8
          %s117 = scalar_lea.vmem [#allocation3], %s116
          %s119 = ssub.s32 128, 128
          %120 = vsyncadd %s114, %s119
          %s121 = smul.addr %s15, 2
          %s122 = smul.addr %s121, 64
          %s123 = scalar_lea.hbm %s1, %s122
          %s125 = sshll.u32 %s117, 4
          %s126 = int_to_ptr.vmem [resolvable:$true] %s125
          %128 = dma.hbm_to_vmem [thread:$0]  %s123, 128, %s126, %s114
        $region24: #{tpu_custom_call.1} parent=19 // pred_fallthru
          _
      $region20: #{tpu_custom_call.1} parent=5 // pred_fallthru
        _
      %p129 = scmp.le.s32.totalorder 1, %s15
      %p130 = scmp.lt.s32.totalorder %s15, 3
      %p131 = pnand %p129, %p130
      %p132 = pneg %p131
      // Predicated region
      $region25: #{tpu_custom_call.1} parent=5 // pred_check
        _
      $region26: #{tpu_custom_call.1} parent=5 // pred_check_branch
        %134 = sbr.rel (%p131) target = $region28
      $region27: #{tpu_custom_call.1} parent=5 // pred_region
        %s135 = ssub.s32 %s15, 1
        %s136 = sand.u32 %s49, 1
        %s137 = scalar_lea.sflag [#allocation4], %s136
        %s138 = sand.u32 %s49, 1
        %s139 = smul.addr %s138, 8
        %s140 = scalar_lea.vmem [#allocation3], %s139
        // Predicated region
        $region29: #{tpu_custom_call.1} parent=27 // pred_check
          %p141 = pneg %p62
        $region30: #{tpu_custom_call.1} parent=27 // pred_check_branch
          %143 = sbr.rel (%p141) target = $region32
        $region31: #{tpu_custom_call.1} parent=27 // pred_region
          %144 = dma.done %s137, 128
        $region32: #{tpu_custom_call.1} parent=27 // pred_fallthru
          _
        %p145 = pneg %p36
        %p146 = pneg %p33
        %s147 = sand.u32 %s49, 1
        %s148 = scalar_lea.sflag [#allocation4], %s147
        %s149 = sand.u32 %s49, 1
        %s150 = smul.addr %s149, 8
        %s151 = scalar_lea.vmem [#allocation3], %s150
        %p152 = pneg %p62
        %p153 = pneg %p59
        %p154 = pneg %p88
        %p155 = pneg %p85
        %s156 = sand.u32 %s75, 1
        %s157 = scalar_lea.sflag [#allocation5], %s156
        %s158 = sand.u32 %s75, 1
        %s159 = smul.addr %s158, 8
        %s160 = scalar_lea.vmem [#allocation6], %s159
        %v161 = vld [vmem:[%s140] sm:$0xff]
        %v163 = vcombine.high %v161, %v161
        %v165 = vand.u32 %v163, 4294901760
        %166 = vmatprep.subr.mxu0 %v165
        %v167 = vand.u32 %v161, 4294901760
        %168 = vmatpush1.xpose.msra.mxu0 %v167
        %169 = vmatprep.subr.mxu0 0.0
        %170 = vmatpush1.xpose.msra.mxu0 0.0
        %171 = vmatprep.subr.mxu0 0.0
        %172 = vmatpush1.xpose.msra.mxu0 0.0
        %173 = vmatprep.subr.mxu0 0.0
        %174 = vmatpush1.xpose.msra.mxu0 0.0
        %175 = vmatprep.subr.mxu0 0.0
        %176 = vmatpush1.xpose.msra.mxu0 0.0
        %177 = vmatprep.subr.mxu0 0.0
        %178 = vmatpush1.xpose.msra.mxu0 0.0
        %179 = vmatprep.subr.mxu0 0.0
        %180 = vmatpush1.xpose.msra.mxu0 0.0
        %181 = vmatprep.subr.mxu0 0.0
        %182 = vmatpush1.xpose.msra.mxu0 0.0
        %183 = vmatprep.subr.mxu0 0.0
        %184 = vmatpush1.xpose.msra.mxu0 0.0
        %185 = vmatprep.subr.mxu0 0.0
        %186 = vmatpush1.xpose.msra.mxu0 0.0
        %187 = vmatprep.subr.mxu0 0.0
        %188 = vmatpush1.xpose.msra.mxu0 0.0
        %189 = vmatprep.subr.mxu0 0.0
        %190 = vmatpush1.xpose.msra.mxu0 0.0
        %191 = vmatprep.subr.mxu0 0.0
        %192 = vmatpush1.xpose.msra.mxu0 0.0
        %193 = vmatprep.subr.mxu0 0.0
        %194 = vmatpush1.xpose.msra.mxu0 0.0
        %195 = vmatprep.subr.mxu0 0.0
        %196 = vmatpush1.xpose.msra.mxu0 0.0
        %197 = vmatprep.subr.mxu0 0.0
        %198 = vmatpush1.xpose.msra.mxu0 0.0
        %199 = vmatprep.subr.mxu0 0.0
        %200 = vmatpush1.xpose.msra.mxu0 0.0
        %201 = vmatprep.subr.mxu0 0.0
        %202 = vmatpush1.xpose.msra.mxu0 0.0
        %203 = vmatprep.subr.mxu0 0.0
        %204 = vmatpush1.xpose.msra.mxu0 0.0
        %205 = vmatprep.subr.mxu0 0.0
        %206 = vmatpush1.xpose.msra.mxu0 0.0
        %207 = vmatprep.subr.mxu0 0.0
        %208 = vmatpush1.xpose.msra.mxu0 0.0
        %209 = vmatprep.subr.mxu0 0.0
        %210 = vmatpush1.xpose.msra.mxu0 0.0
        %211 = vmatprep.subr.mxu0 0.0
        %212 = vmatpush1.xpose.msra.mxu0 0.0
        %213 = vmatprep.subr.mxu0 0.0
        %214 = vmatpush1.xpose.msra.mxu0 0.0
        %215 = vmatprep.subr.mxu0 0.0
        %216 = vmatpush1.xpose.msra.mxu0 0.0
        %217 = vmatprep.subr.mxu0 0.0
        %218 = vmatpush1.xpose.msra.mxu0 0.0
        %219 = vmatprep.subr.mxu0 0.0
        %220 = vmatpush1.xpose.msra.mxu0 0.0
        %221 = vmatprep.subr.mxu0 0.0
        %222 = vmatpush1.xpose.msra.mxu0 0.0
        %223 = vmatprep.subr.mxu0 0.0
        %224 = vmatpush1.xpose.msra.mxu0 0.0
        %225 = vmatprep.subr.mxu0 0.0
        %226 = vmatpush1.xpose.msra.mxu0 0.0
        %227 = vmatprep.subr.mxu0 0.0
        %228 = vmatpush1.xpose.msra.mxu0 0.0
        %229 = vmatprep.subr.mxu0 0.0
        %230 = vmatpush1.xpose.msra.mxu0 0.0
        %v231 = vand.u32 %v163, 4294901760
        %v232 = vsub.f32 %v163, %v231
        %v233 = vand.u32 %v232, 4294901760
        %v234 = vsub.f32 %v232, %v233
        %v235 = vand.u32 %v234, 4294901760
        %236 = vmatprep.mubr.f32.mxu0 %v235
        %v237 = vand.u32 %v161, 4294901760
        %v238 = vsub.f32 %v161, %v237
        %v239 = vand.u32 %v238, 4294901760
        %v240 = vsub.f32 %v238, %v239
        %v241 = vand.u32 %v240, 4294901760
        %242 = vmatmul.mubr.f32.gmra.mrb[0].mxu0 %v241
        %v243 = vpop.f32.mrb[0].mxu0
        %v244 = vadd.f32 0.0, %v243
        %v245 = vpop.f32.mrb[0].mxu0
        %246 = vdwg.mxu0
        %v247 = vand.u32 %v163, 4294901760
        %v248 = vsub.f32 %v163, %v247
        %v249 = vand.u32 %v248, 4294901760
        %v250 = vsub.f32 %v248, %v249
        %v251 = vand.u32 %v250, 4294901760
        %252 = vmatprep.subr.mxu0 %v251
        %v253 = vand.u32 %v161, 4294901760
        %v254 = vsub.f32 %v161, %v253
        %v255 = vand.u32 %v254, 4294901760
        %v256 = vsub.f32 %v254, %v255
        %v257 = vand.u32 %v256, 4294901760
        %258 = vmatpush1.xpose.msra.mxu0 %v257
        %259 = vmatprep.subr.mxu0 0.0
        %260 = vmatpush1.xpose.msra.mxu0 0.0
        %261 = vmatprep.subr.mxu0 0.0
        %262 = vmatpush1.xpose.msra.mxu0 0.0
        %263 = vmatprep.subr.mxu0 0.0
        %264 = vmatpush1.xpose.msra.mxu0 0.0
        %265 = vmatprep.subr.mxu0 0.0
        %266 = vmatpush1.xpose.msra.mxu0 0.0
        %267 = vmatprep.subr.mxu0 0.0
        %268 = vmatpush1.xpose.msra.mxu0 0.0
        %269 = vmatprep.subr.mxu0 0.0
        %270 = vmatpush1.xpose.msra.mxu0 0.0
        %271 = vmatprep.subr.mxu0 0.0
        %272 = vmatpush1.xpose.msra.mxu0 0.0
        %273 = vmatprep.subr.mxu0 0.0
        %274 = vmatpush1.xpose.msra.mxu0 0.0
        %275 = vmatprep.subr.mxu0 0.0
        %276 = vmatpush1.xpose.msra.mxu0 0.0
        %277 = vmatprep.subr.mxu0 0.0
        %278 = vmatpush1.xpose.msra.mxu0 0.0
        %279 = vmatprep.subr.mxu0 0.0
        %280 = vmatpush1.xpose.msra.mxu0 0.0
        %281 = vmatprep.subr.mxu0 0.0
        %282 = vmatpush1.xpose.msra.mxu0 0.0
        %283 = vmatprep.subr.mxu0 0.0
        %284 = vmatpush1.xpose.msra.mxu0 0.0
        %285 = vmatprep.subr.mxu0 0.0
        %286 = vmatpush1.xpose.msra.mxu0 0.0
        %287 = vmatprep.subr.mxu0 0.0
        %288 = vmatpush1.xpose.msra.mxu0 0.0
        %289 = vmatprep.subr.mxu0 0.0
        %290 = vmatpush1.xpose.msra.mxu0 0.0
        %291 = vmatprep.subr.mxu0 0.0
        %292 = vmatpush1.xpose.msra.mxu0 0.0
        %293 = vmatprep.subr.mxu0 0.0
        %294 = vmatpush1.xpose.msra.mxu0 0.0
        %295 = vmatprep.subr.mxu0 0.0
        %296 = vmatpush1.xpose.msra.mxu0 0.0
        %297 = vmatprep.subr.mxu0 0.0
        %298 = vmatpush1.xpose.msra.mxu0 0.0
        %299 = vmatprep.subr.mxu0 0.0
        %300 = vmatpush1.xpose.msra.mxu0 0.0
        %301 = vmatprep.subr.mxu0 0.0
        %302 = vmatpush1.xpose.msra.mxu0 0.0
        %303 = vmatprep.subr.mxu0 0.0
        %304 = vmatpush1.xpose.msra.mxu0 0.0
        %305 = vmatprep.subr.mxu0 0.0
        %306 = vmatpush1.xpose.msra.mxu0 0.0
        %307 = vmatprep.subr.mxu0 0.0
        %308 = vmatpush1.xpose.msra.mxu0 0.0
        %309 = vmatprep.subr.mxu0 0.0
        %310 = vmatpush1.xpose.msra.mxu0 0.0
        %311 = vmatprep.subr.mxu0 0.0
        %312 = vmatpush1.xpose.msra.mxu0 0.0
        %313 = vmatprep.subr.mxu0 0.0
        %314 = vmatpush1.xpose.msra.mxu0 0.0
        %315 = vmatprep.subr.mxu0 0.0
        %316 = vmatpush1.xpose.msra.mxu0 0.0
        %317 = vmatprep.subr.mxu0 0.0
        %318 = vmatpush1.xpose.msra.mxu0 0.0
        %319 = vmatprep.subr.mxu0 0.0
        %320 = vmatpush1.xpose.msra.mxu0 0.0
        %v321 = vand.u32 %v163, 4294901760
        %322 = vmatprep.mubr.f32.mxu0 %v321
        %v323 = vand.u32 %v161, 4294901760
        %324 = vmatmul.mubr.f32.gmra.mrb[0].mxu0 %v323
        %v325 = vpop.f32.mrb[0].mxu0
        %v326 = vadd.f32 %v244, %v325
        %v327 = vpop.f32.mrb[0].mxu0
        %328 = vdwg.mxu0
        %v329 = vand.u32 %v163, 4294901760
        %v330 = vsub.f32 %v163, %v329
        %331 = vmatprep.subr.mxu0 %v330
        %v332 = vand.u32 %v161, 4294901760
        %v333 = vsub.f32 %v161, %v332
        %334 = vmatpush1.xpose.msra.mxu0 %v333
        %335 = vmatprep.subr.mxu0 0.0
        %336 = vmatpush1.xpose.msra.mxu0 0.0
        %337 = vmatprep.subr.mxu0 0.0
        %338 = vmatpush1.xpose.msra.mxu0 0.0
        %339 = vmatprep.subr.mxu0 0.0
        %340 = vmatpush1.xpose.msra.mxu0 0.0
        %341 = vmatprep.subr.mxu0 0.0
        %342 = vmatpush1.xpose.msra.mxu0 0.0
        %343 = vmatprep.subr.mxu0 0.0
        %344 = vmatpush1.xpose.msra.mxu0 0.0
        %345 = vmatprep.subr.mxu0 0.0
        %346 = vmatpush1.xpose.msra.mxu0 0.0
        %347 = vmatprep.subr.mxu0 0.0
        %348 = vmatpush1.xpose.msra.mxu0 0.0
        %349 = vmatprep.subr.mxu0 0.0
        %350 = vmatpush1.xpose.msra.mxu0 0.0
        %351 = vmatprep.subr.mxu0 0.0
        %352 = vmatpush1.xpose.msra.mxu0 0.0
        %353 = vmatprep.subr.mxu0 0.0
        %354 = vmatpush1.xpose.msra.mxu0 0.0
        %355 = vmatprep.subr.mxu0 0.0
        %356 = vmatpush1.xpose.msra.mxu0 0.0
        %357 = vmatprep.subr.mxu0 0.0
        %358 = vmatpush1.xpose.msra.mxu0 0.0
        %359 = vmatprep.subr.mxu0 0.0
        %360 = vmatpush1.xpose.msra.mxu0 0.0
        %361 = vmatprep.subr.mxu0 0.0
        %362 = vmatpush1.xpose.msra.mxu0 0.0
        %363 = vmatprep.subr.mxu0 0.0
        %364 = vmatpush1.xpose.msra.mxu0 0.0
        %365 = vmatprep.subr.mxu0 0.0
        %366 = vmatpush1.xpose.msra.mxu0 0.0
        %367 = vmatprep.subr.mxu0 0.0
        %368 = vmatpush1.xpose.msra.mxu0 0.0
        %369 = vmatprep.subr.mxu0 0.0
        %370 = vmatpush1.xpose.msra.mxu0 0.0
        %371 = vmatprep.subr.mxu0 0.0
        %372 = vmatpush1.xpose.msra.mxu0 0.0
        %373 = vmatprep.subr.mxu0 0.0
        %374 = vmatpush1.xpose.msra.mxu0 0.0
        %375 = vmatprep.subr.mxu0 0.0
        %376 = vmatpush1.xpose.msra.mxu0 0.0
        %377 = vmatprep.subr.mxu0 0.0
        %378 = vmatpush1.xpose.msra.mxu0 0.0
        %379 = vmatprep.subr.mxu0 0.0
        %380 = vmatpush1.xpose.msra.mxu0 0.0
        %381 = vmatprep.subr.mxu0 0.0
        %382 = vmatpush1.xpose.msra.mxu0 0.0
        %383 = vmatprep.subr.mxu0 0.0
        %384 = vmatpush1.xpose.msra.mxu0 0.0
        %385 = vmatprep.subr.mxu0 0.0
        %386 = vmatpush1.xpose.msra.mxu0 0.0
        %387 = vmatprep.subr.mxu0 0.0
        %388 = vmatpush1.xpose.msra.mxu0 0.0
        %389 = vmatprep.subr.mxu0 0.0
        %390 = vmatpush1.xpose.msra.mxu0 0.0
        %391 = vmatprep.subr.mxu0 0.0
        %392 = vmatpush1.xpose.msra.mxu0 0.0
        %393 = vmatprep.subr.mxu0 0.0
        %394 = vmatpush1.xpose.msra.mxu0 0.0
        %395 = vmatprep.subr.mxu0 0.0
        %396 = vmatpush1.xpose.msra.mxu0 0.0
        %v397 = vand.u32 %v163, 4294901760
        %v398 = vsub.f32 %v163, %v397
        %399 = vmatprep.mubr.f32.mxu0 %v398
        %v400 = vand.u32 %v161, 4294901760
        %v401 = vsub.f32 %v161, %v400
        %402 = vmatmul.mubr.f32.gmra.mrb[0].mxu0 %v401
        %v403 = vpop.f32.mrb[0].mxu0
        %v404 = vadd.f32 %v326, %v403
        %v405 = vpop.f32.mrb[0].mxu0
        %406 = vdwg.mxu0
        %v407 = vand.u32 %v163, 4294901760
        %408 = vmatprep.subr.mxu0 %v407
        %v409 = vand.u32 %v161, 4294901760
        %410 = vmatpush1.xpose.msra.mxu0 %v409
        %411 = vmatprep.subr.mxu0 0.0
        %412 = vmatpush1.xpose.msra.mxu0 0.0
        %413 = vmatprep.subr.mxu0 0.0
        %414 = vmatpush1.xpose.msra.mxu0 0.0
        %415 = vmatprep.subr.mxu0 0.0
        %416 = vmatpush1.xpose.msra.mxu0 0.0
        %417 = vmatprep.subr.mxu0 0.0
        %418 = vmatpush1.xpose.msra.mxu0 0.0
        %419 = vmatprep.subr.mxu0 0.0
        %420 = vmatpush1.xpose.msra.mxu0 0.0
        %421 = vmatprep.subr.mxu0 0.0
        %422 = vmatpush1.xpose.msra.mxu0 0.0
        %423 = vmatprep.subr.mxu0 0.0
        %424 = vmatpush1.xpose.msra.mxu0 0.0
        %425 = vmatprep.subr.mxu0 0.0
        %426 = vmatpush1.xpose.msra.mxu0 0.0
        %427 = vmatprep.subr.mxu0 0.0
        %428 = vmatpush1.xpose.msra.mxu0 0.0
        %429 = vmatprep.subr.mxu0 0.0
        %430 = vmatpush1.xpose.msra.mxu0 0.0
        %431 = vmatprep.subr.mxu0 0.0
        %432 = vmatpush1.xpose.msra.mxu0 0.0
        %433 = vmatprep.subr.mxu0 0.0
        %434 = vmatpush1.xpose.msra.mxu0 0.0
        %435 = vmatprep.subr.mxu0 0.0
        %436 = vmatpush1.xpose.msra.mxu0 0.0
        %437 = vmatprep.subr.mxu0 0.0
        %438 = vmatpush1.xpose.msra.mxu0 0.0
        %439 = vmatprep.subr.mxu0 0.0
        %440 = vmatpush1.xpose.msra.mxu0 0.0
        %441 = vmatprep.subr.mxu0 0.0
        %442 = vmatpush1.xpose.msra.mxu0 0.0
        %443 = vmatprep.subr.mxu0 0.0
        %444 = vmatpush1.xpose.msra.mxu0 0.0
        %445 = vmatprep.subr.mxu0 0.0
        %446 = vmatpush1.xpose.msra.mxu0 0.0
        %447 = vmatprep.subr.mxu0 0.0
        %448 = vmatpush1.xpose.msra.mxu0 0.0
        %449 = vmatprep.subr.mxu0 0.0
        %450 = vmatpush1.xpose.msra.mxu0 0.0
        %451 = vmatprep.subr.mxu0 0.0
        %452 = vmatpush1.xpose.msra.mxu0 0.0
        %453 = vmatprep.subr.mxu0 0.0
        %454 = vmatpush1.xpose.msra.mxu0 0.0
        %455 = vmatprep.subr.mxu0 0.0
        %456 = vmatpush1.xpose.msra.mxu0 0.0
        %457 = vmatprep.subr.mxu0 0.0
        %458 = vmatpush1.xpose.msra.mxu0 0.0
        %459 = vmatprep.subr.mxu0 0.0
        %460 = vmatpush1.xpose.msra.mxu0 0.0
        %461 = vmatprep.subr.mxu0 0.0
        %462 = vmatpush1.xpose.msra.mxu0 0.0
        %463 = vmatprep.subr.mxu0 0.0
        %464 = vmatpush1.xpose.msra.mxu0 0.0
        %465 = vmatprep.subr.mxu0 0.0
        %466 = vmatpush1.xpose.msra.mxu0 0.0
        %467 = vmatprep.subr.mxu0 0.0
        %468 = vmatpush1.xpose.msra.mxu0 0.0
        %469 = vmatprep.subr.mxu0 0.0
        %470 = vmatpush1.xpose.msra.mxu0 0.0
        %471 = vmatprep.subr.mxu0 0.0
        %472 = vmatpush1.xpose.msra.mxu0 0.0
        %v473 = vand.u32 %v163, 4294901760
        %v474 = vsub.f32 %v163, %v473
        %v475 = vand.u32 %v474, 4294901760
        %476 = vmatprep.mubr.f32.mxu0 %v475
        %v477 = vand.u32 %v161, 4294901760
        %v478 = vsub.f32 %v161, %v477
        %v479 = vand.u32 %v478, 4294901760
        %480 = vmatmul.mubr.f32.gmra.mrb[0].mxu0 %v479
        %v481 = vpop.f32.mrb[0].mxu0
        %v482 = vadd.f32 %v404, %v481
        %v483 = vpop.f32.mrb[0].mxu0
        %484 = vdwg.mxu0
        %v485 = vand.u32 %v163, 4294901760
        %v486 = vsub.f32 %v163, %v485
        %v487 = vand.u32 %v486, 4294901760
        %488 = vmatprep.subr.mxu0 %v487
        %v489 = vand.u32 %v161, 4294901760
        %v490 = vsub.f32 %v161, %v489
        %v491 = vand.u32 %v490, 4294901760
        %492 = vmatpush1.xpose.msra.mxu0 %v491
        %493 = vmatprep.subr.mxu0 0.0
        %494 = vmatpush1.xpose.msra.mxu0 0.0
        %495 = vmatprep.subr.mxu0 0.0
        %496 = vmatpush1.xpose.msra.mxu0 0.0
        %497 = vmatprep.subr.mxu0 0.0
        %498 = vmatpush1.xpose.msra.mxu0 0.0
        %499 = vmatprep.subr.mxu0 0.0
        %500 = vmatpush1.xpose.msra.mxu0 0.0
        %501 = vmatprep.subr.mxu0 0.0
        %502 = vmatpush1.xpose.msra.mxu0 0.0
        %503 = vmatprep.subr.mxu0 0.0
        %504 = vmatpush1.xpose.msra.mxu0 0.0
        %505 = vmatprep.subr.mxu0 0.0
        %506 = vmatpush1.xpose.msra.mxu0 0.0
        %507 = vmatprep.subr.mxu0 0.0
        %508 = vmatpush1.xpose.msra.mxu0 0.0
        %509 = vmatprep.subr.mxu0 0.0
        %510 = vmatpush1.xpose.msra.mxu0 0.0
        %511 = vmatprep.subr.mxu0 0.0
        %512 = vmatpush1.xpose.msra.mxu0 0.0
        %513 = vmatprep.subr.mxu0 0.0
        %514 = vmatpush1.xpose.msra.mxu0 0.0
        %515 = vmatprep.subr.mxu0 0.0
        %516 = vmatpush1.xpose.msra.mxu0 0.0
        %517 = vmatprep.subr.mxu0 0.0
        %518 = vmatpush1.xpose.msra.mxu0 0.0
        %519 = vmatprep.subr.mxu0 0.0
        %520 = vmatpush1.xpose.msra.mxu0 0.0
        %521 = vmatprep.subr.mxu0 0.0
        %522 = vmatpush1.xpose.msra.mxu0 0.0
        %523 = vmatprep.subr.mxu0 0.0
        %524 = vmatpush1.xpose.msra.mxu0 0.0
        %525 = vmatprep.subr.mxu0 0.0
        %526 = vmatpush1.xpose.msra.mxu0 0.0
        %527 = vmatprep.subr.mxu0 0.0
        %528 = vmatpush1.xpose.msra.mxu0 0.0
        %529 = vmatprep.subr.mxu0 0.0
        %530 = vmatpush1.xpose.msra.mxu0 0.0
        %531 = vmatprep.subr.mxu0 0.0
        %532 = vmatpush1.xpose.msra.mxu0 0.0
        %533 = vmatprep.subr.mxu0 0.0
        %534 = vmatpush1.xpose.msra.mxu0 0.0
        %535 = vmatprep.subr.mxu0 0.0
        %536 = vmatpush1.xpose.msra.mxu0 0.0
        %537 = vmatprep.subr.mxu0 0.0
        %538 = vmatpush1.xpose.msra.mxu0 0.0
        %539 = vmatprep.subr.mxu0 0.0
        %540 = vmatpush1.xpose.msra.mxu0 0.0
        %541 = vmatprep.subr.mxu0 0.0
        %542 = vmatpush1.xpose.msra.mxu0 0.0
        %543 = vmatprep.subr.mxu0 0.0
        %544 = vmatpush1.xpose.msra.mxu0 0.0
        %545 = vmatprep.subr.mxu0 0.0
        %546 = vmatpush1.xpose.msra.mxu0 0.0
        %547 = vmatprep.subr.mxu0 0.0
        %548 = vmatpush1.xpose.msra.mxu0 0.0
        %549 = vmatprep.subr.mxu0 0.0
        %550 = vmatpush1.xpose.msra.mxu0 0.0
        %551 = vmatprep.subr.mxu0 0.0
        %552 = vmatpush1.xpose.msra.mxu0 0.0
        %553 = vmatprep.subr.mxu0 0.0
        %554 = vmatpush1.xpose.msra.mxu0 0.0
        %v555 = vand.u32 %v163, 4294901760
        %556 = vmatprep.mubr.f32.mxu0 %v555
        %v557 = vand.u32 %v161, 4294901760
        %558 = vmatmul.mubr.f32.gmra.mrb[0].mxu0 %v557
        %v559 = vpop.f32.mrb[0].mxu0
        %v560 = vadd.f32 %v482, %v559
        %v561 = vpop.f32.mrb[0].mxu0
        %562 = vdwg.mxu0
        %v563 = vand.u32 %v163, 4294901760
        %564 = vmatprep.subr.mxu0 %v563
        %v565 = vand.u32 %v161, 4294901760
        %566 = vmatpush1.xpose.msra.mxu0 %v565
        %567 = vmatprep.subr.mxu0 0.0
        %568 = vmatpush1.xpose.msra.mxu0 0.0
        %569 = vmatprep.subr.mxu0 0.0
        %570 = vmatpush1.xpose.msra.mxu0 0.0
        %571 = vmatprep.subr.mxu0 0.0
        %572 = vmatpush1.xpose.msra.mxu0 0.0
        %573 = vmatprep.subr.mxu0 0.0
        %574 = vmatpush1.xpose.msra.mxu0 0.0
        %575 = vmatprep.subr.mxu0 0.0
        %576 = vmatpush1.xpose.msra.mxu0 0.0
        %577 = vmatprep.subr.mxu0 0.0
        %578 = vmatpush1.xpose.msra.mxu0 0.0
        %579 = vmatprep.subr.mxu0 0.0
        %580 = vmatpush1.xpose.msra.mxu0 0.0
        %581 = vmatprep.subr.mxu0 0.0
        %582 = vmatpush1.xpose.msra.mxu0 0.0
        %583 = vmatprep.subr.mxu0 0.0
        %584 = vmatpush1.xpose.msra.mxu0 0.0
        %585 = vmatprep.subr.mxu0 0.0
        %586 = vmatpush1.xpose.msra.mxu0 0.0
        %587 = vmatprep.subr.mxu0 0.0
        %588 = vmatpush1.xpose.msra.mxu0 0.0
        %589 = vmatprep.subr.mxu0 0.0
        %590 = vmatpush1.xpose.msra.mxu0 0.0
        %591 = vmatprep.subr.mxu0 0.0
        %592 = vmatpush1.xpose.msra.mxu0 0.0
        %593 = vmatprep.subr.mxu0 0.0
        %594 = vmatpush1.xpose.msra.mxu0 0.0
        %595 = vmatprep.subr.mxu0 0.0
        %596 = vmatpush1.xpose.msra.mxu0 0.0
        %597 = vmatprep.subr.mxu0 0.0
        %598 = vmatpush1.xpose.msra.mxu0 0.0
        %599 = vmatprep.subr.mxu0 0.0
        %600 = vmatpush1.xpose.msra.mxu0 0.0
        %601 = vmatprep.subr.mxu0 0.0
        %602 = vmatpush1.xpose.msra.mxu0 0.0
        %603 = vmatprep.subr.mxu0 0.0
        %604 = vmatpush1.xpose.msra.mxu0 0.0
        %605 = vmatprep.subr.mxu0 0.0
        %606 = vmatpush1.xpose.msra.mxu0 0.0
        %607 = vmatprep.subr.mxu0 0.0
        %608 = vmatpush1.xpose.msra.mxu0 0.0
        %609 = vmatprep.subr.mxu0 0.0
        %610 = vmatpush1.xpose.msra.mxu0 0.0
        %611 = vmatprep.subr.mxu0 0.0
        %612 = vmatpush1.xpose.msra.mxu0 0.0
        %613 = vmatprep.subr.mxu0 0.0
        %614 = vmatpush1.xpose.msra.mxu0 0.0
        %615 = vmatprep.subr.mxu0 0.0
        %616 = vmatpush1.xpose.msra.mxu0 0.0
        %617 = vmatprep.subr.mxu0 0.0
        %618 = vmatpush1.xpose.msra.mxu0 0.0
        %619 = vmatprep.subr.mxu0 0.0
        %620 = vmatpush1.xpose.msra.mxu0 0.0
        %621 = vmatprep.subr.mxu0 0.0
        %622 = vmatpush1.xpose.msra.mxu0 0.0
        %623 = vmatprep.subr.mxu0 0.0
        %624 = vmatpush1.xpose.msra.mxu0 0.0
        %625 = vmatprep.subr.mxu0 0.0
        %626 = vmatpush1.xpose.msra.mxu0 0.0
        %627 = vmatprep.subr.mxu0 0.0
        %628 = vmatpush1.xpose.msra.mxu0 0.0
        %v629 = vand.u32 %v163, 4294901760
        %630 = vmatprep.mubr.f32.mxu0 %v629
        %v631 = vand.u32 %v161, 4294901760
        %632 = vmatmul.mubr.f32.gmra.mrb[0].mxu0 %v631
        %v633 = vpop.f32.mrb[0].mxu0
        %v634 = vadd.f32 %v560, %v633
        %v635 = vpop.f32.mrb[0].mxu0
        %636 = vdwg.mxu0
        %vm637 = vcmask 27648
        %v638 = vsel %vm637, %v634, inf
        %639 = vmin.xlane.f32.xlu0 %v638
        %v640 = vpop.xlane.xlu0 %639
        %v641 = vsub.f32 %v640, %v634
        %v642 = vmul.f32 %v641, 1.442695
        %v643 = vpow.pop %v642
        %v644 = vsel %vm637, %v643, 0.0
        %645 = vadd.xlane.f32.xlu0 %v644
        %v646 = vpop.xlane.xlu0 %645
        %v647 = vrcp.pop %v646
        %v648 = vmul.f32 1.0, %v647
        %v649 = vmul.f32 %v643, %v648
        %vm650 = vcmask 31744
        %v652 = vsel %vm650, %v649, 0
        %vm654 = vcmask 1043456
        %v655 = vsel %vm654, %v161, 0
        %v657 = vsel %vm654, %v163, 0
        %v659 = vand.u32 %v657, 4294901760
        %660 = vmatprep.subr.mxu0 %v659
        %v661 = vand.u32 %v655, 4294901760
        %662 = vmatpush1.msra.mxu0 %v661
        %663 = vmatprep.subr.mxu0 0.0
        %664 = vmatpush1.msra.mxu0 0.0
        %665 = vmatprep.subr.mxu0 0.0
        %666 = vmatpush1.msra.mxu0 0.0
        %667 = vmatprep.subr.mxu0 0.0
        %668 = vmatpush1.msra.mxu0 0.0
        %669 = vmatprep.subr.mxu0 0.0
        %670 = vmatpush1.msra.mxu0 0.0
        %671 = vmatprep.subr.mxu0 0.0
        %672 = vmatpush1.msra.mxu0 0.0
        %673 = vmatprep.subr.mxu0 0.0
        %674 = vmatpush1.msra.mxu0 0.0
        %675 = vmatprep.subr.mxu0 0.0
        %676 = vmatpush1.msra.mxu0 0.0
        %677 = vmatprep.subr.mxu0 0.0
        %678 = vmatpush1.msra.mxu0 0.0
        %679 = vmatprep.subr.mxu0 0.0
        %680 = vmatpush1.msra.mxu0 0.0
        %681 = vmatprep.subr.mxu0 0.0
        %682 = vmatpush1.msra.mxu0 0.0
        %683 = vmatprep.subr.mxu0 0.0
        %684 = vmatpush1.msra.mxu0 0.0
        %685 = vmatprep.subr.mxu0 0.0
        %686 = vmatpush1.msra.mxu0 0.0
        %687 = vmatprep.subr.mxu0 0.0
        %688 = vmatpush1.msra.mxu0 0.0
        %689 = vmatprep.subr.mxu0 0.0
        %690 = vmatpush1.msra.mxu0 0.0
        %691 = vmatprep.subr.mxu0 0.0
        %692 = vmatpush1.msra.mxu0 0.0
        %693 = vmatprep.subr.mxu0 0.0
        %694 = vmatpush1.msra.mxu0 0.0
        %695 = vmatprep.subr.mxu0 0.0
        %696 = vmatpush1.msra.mxu0 0.0
        %697 = vmatprep.subr.mxu0 0.0
        %698 = vmatpush1.msra.mxu0 0.0
        %699 = vmatprep.subr.mxu0 0.0
        %700 = vmatpush1.msra.mxu0 0.0
        %701 = vmatprep.subr.mxu0 0.0
        %702 = vmatpush1.msra.mxu0 0.0
        %703 = vmatprep.subr.mxu0 0.0
        %704 = vmatpush1.msra.mxu0 0.0
        %705 = vmatprep.subr.mxu0 0.0
        %706 = vmatpush1.msra.mxu0 0.0
        %707 = vmatprep.subr.mxu0 0.0
        %708 = vmatpush1.msra.mxu0 0.0
        %709 = vmatprep.subr.mxu0 0.0
        %710 = vmatpush1.msra.mxu0 0.0
        %711 = vmatprep.subr.mxu0 0.0
        %712 = vmatpush1.msra.mxu0 0.0
        %713 = vmatprep.subr.mxu0 0.0
        %714 = vmatpush1.msra.mxu0 0.0
        %715 = vmatprep.subr.mxu0 0.0
        %716 = vmatpush1.msra.mxu0 0.0
        %717 = vmatprep.subr.mxu0 0.0
        %718 = vmatpush1.msra.mxu0 0.0
        %719 = vmatprep.subr.mxu0 0.0
        %720 = vmatpush1.msra.mxu0 0.0
        %721 = vmatprep.subr.mxu0 0.0
        %722 = vmatpush1.msra.mxu0 0.0
        %723 = vmatprep.subr.mxu0 0.0
        %724 = vmatpush1.msra.mxu0 0.0
        %725 = vmatprep.mubr.f32.mxu0 0.0
        %v726 = vand.u32 %v652, 4294901760
        %v727 = vsub.f32 %v652, %v726
        %v728 = vand.u32 %v727, 4294901760
        %v729 = vsub.f32 %v727, %v728
        %v730 = vand.u32 %v729, 4294901760
        %731 = vmatmul.mubr.f32.gmra.mrb[0].mxu0 %v730
        %v732 = vpop.f32.mrb[0].mxu0
        %v733 = vadd.f32 0.0, %v732
        %v734 = vpop.f32.mrb[0].mxu0
        %v735 = vadd.f32 0.0, %v734
        %736 = vdwg.mxu0
        %v737 = vand.u32 %v657, 4294901760
        %v738 = vsub.f32 %v657, %v737
        %v739 = vand.u32 %v738, 4294901760
        %v740 = vsub.f32 %v738, %v739
        %v741 = vand.u32 %v740, 4294901760
        %742 = vmatprep.subr.mxu0 %v741
        %v743 = vand.u32 %v655, 4294901760
        %v744 = vsub.f32 %v655, %v743
        %v745 = vand.u32 %v744, 4294901760
        %v746 = vsub.f32 %v744, %v745
        %v747 = vand.u32 %v746, 4294901760
        %748 = vmatpush1.msra.mxu0 %v747
        %749 = vmatprep.subr.mxu0 0.0
        %750 = vmatpush1.msra.mxu0 0.0
        %751 = vmatprep.subr.mxu0 0.0
        %752 = vmatpush1.msra.mxu0 0.0
        %753 = vmatprep.subr.mxu0 0.0
        %754 = vmatpush1.msra.mxu0 0.0
        %755 = vmatprep.subr.mxu0 0.0
        %756 = vmatpush1.msra.mxu0 0.0
        %757 = vmatprep.subr.mxu0 0.0
        %758 = vmatpush1.msra.mxu0 0.0
        %759 = vmatprep.subr.mxu0 0.0
        %760 = vmatpush1.msra.mxu0 0.0
        %761 = vmatprep.subr.mxu0 0.0
        %762 = vmatpush1.msra.mxu0 0.0
        %763 = vmatprep.subr.mxu0 0.0
        %764 = vmatpush1.msra.mxu0 0.0
        %765 = vmatprep.subr.mxu0 0.0
        %766 = vmatpush1.msra.mxu0 0.0
        %767 = vmatprep.subr.mxu0 0.0
        %768 = vmatpush1.msra.mxu0 0.0
        %769 = vmatprep.subr.mxu0 0.0
        %770 = vmatpush1.msra.mxu0 0.0
        %771 = vmatprep.subr.mxu0 0.0
        %772 = vmatpush1.msra.mxu0 0.0
        %773 = vmatprep.subr.mxu0 0.0
        %774 = vmatpush1.msra.mxu0 0.0
        %775 = vmatprep.subr.mxu0 0.0
        %776 = vmatpush1.msra.mxu0 0.0
        %777 = vmatprep.subr.mxu0 0.0
        %778 = vmatpush1.msra.mxu0 0.0
        %779 = vmatprep.subr.mxu0 0.0
        %780 = vmatpush1.msra.mxu0 0.0
        %781 = vmatprep.subr.mxu0 0.0
        %782 = vmatpush1.msra.mxu0 0.0
        %783 = vmatprep.subr.mxu0 0.0
        %784 = vmatpush1.msra.mxu0 0.0
        %785 = vmatprep.subr.mxu0 0.0
        %786 = vmatpush1.msra.mxu0 0.0
        %787 = vmatprep.subr.mxu0 0.0
        %788 = vmatpush1.msra.mxu0 0.0
        %789 = vmatprep.subr.mxu0 0.0
        %790 = vmatpush1.msra.mxu0 0.0
        %791 = vmatprep.subr.mxu0 0.0
        %792 = vmatpush1.msra.mxu0 0.0
        %793 = vmatprep.subr.mxu0 0.0
        %794 = vmatpush1.msra.mxu0 0.0
        %795 = vmatprep.subr.mxu0 0.0
        %796 = vmatpush1.msra.mxu0 0.0
        %797 = vmatprep.subr.mxu0 0.0
        %798 = vmatpush1.msra.mxu0 0.0
        %799 = vmatprep.subr.mxu0 0.0
        %800 = vmatpush1.msra.mxu0 0.0
        %801 = vmatprep.subr.mxu0 0.0
        %802 = vmatpush1.msra.mxu0 0.0
        %803 = vmatprep.subr.mxu0 0.0
        %804 = vmatpush1.msra.mxu0 0.0
        %805 = vmatprep.subr.mxu0 0.0
        %806 = vmatpush1.msra.mxu0 0.0
        %807 = vmatprep.subr.mxu0 0.0
        %808 = vmatpush1.msra.mxu0 0.0
        %809 = vmatprep.subr.mxu0 0.0
        %810 = vmatpush1.msra.mxu0 0.0
        %811 = vmatprep.mubr.f32.mxu0 0.0
        %v812 = vand.u32 %v652, 4294901760
        %813 = vmatmul.mubr.f32.gmra.mrb[0].mxu0 %v812
        %v814 = vpop.f32.mrb[0].mxu0
        %v815 = vadd.f32 %v733, %v814
        %v816 = vpop.f32.mrb[0].mxu0
        %v817 = vadd.f32 %v735, %v816
        %818 = vdwg.mxu0
        %v819 = vand.u32 %v657, 4294901760
        %v820 = vsub.f32 %v657, %v819
        %821 = vmatprep.subr.mxu0 %v820
        %v822 = vand.u32 %v655, 4294901760
        %v823 = vsub.f32 %v655, %v822
        %824 = vmatpush1.msra.mxu0 %v823
        %825 = vmatprep.subr.mxu0 0.0
        %826 = vmatpush1.msra.mxu0 0.0
        %827 = vmatprep.subr.mxu0 0.0
        %828 = vmatpush1.msra.mxu0 0.0
        %829 = vmatprep.subr.mxu0 0.0
        %830 = vmatpush1.msra.mxu0 0.0
        %831 = vmatprep.subr.mxu0 0.0
        %832 = vmatpush1.msra.mxu0 0.0
        %833 = vmatprep.subr.mxu0 0.0
        %834 = vmatpush1.msra.mxu0 0.0
        %835 = vmatprep.subr.mxu0 0.0
        %836 = vmatpush1.msra.mxu0 0.0
        %837 = vmatprep.subr.mxu0 0.0
        %838 = vmatpush1.msra.mxu0 0.0
        %839 = vmatprep.subr.mxu0 0.0
        %840 = vmatpush1.msra.mxu0 0.0
        %841 = vmatprep.subr.mxu0 0.0
        %842 = vmatpush1.msra.mxu0 0.0
        %843 = vmatprep.subr.mxu0 0.0
        %844 = vmatpush1.msra.mxu0 0.0
        %845 = vmatprep.subr.mxu0 0.0
        %846 = vmatpush1.msra.mxu0 0.0
        %847 = vmatprep.subr.mxu0 0.0
        %848 = vmatpush1.msra.mxu0 0.0
        %849 = vmatprep.subr.mxu0 0.0
        %850 = vmatpush1.msra.mxu0 0.0
        %851 = vmatprep.subr.mxu0 0.0
        %852 = vmatpush1.msra.mxu0 0.0
        %853 = vmatprep.subr.mxu0 0.0
        %854 = vmatpush1.msra.mxu0 0.0
        %855 = vmatprep.subr.mxu0 0.0
        %856 = vmatpush1.msra.mxu0 0.0
        %857 = vmatprep.subr.mxu0 0.0
        %858 = vmatpush1.msra.mxu0 0.0
        %859 = vmatprep.subr.mxu0 0.0
        %860 = vmatpush1.msra.mxu0 0.0
        %861 = vmatprep.subr.mxu0 0.0
        %862 = vmatpush1.msra.mxu0 0.0
        %863 = vmatprep.subr.mxu0 0.0
        %864 = vmatpush1.msra.mxu0 0.0
        %865 = vmatprep.subr.mxu0 0.0
        %866 = vmatpush1.msra.mxu0 0.0
        %867 = vmatprep.subr.mxu0 0.0
        %868 = vmatpush1.msra.mxu0 0.0
        %869 = vmatprep.subr.mxu0 0.0
        %870 = vmatpush1.msra.mxu0 0.0
        %871 = vmatprep.subr.mxu0 0.0
        %872 = vmatpush1.msra.mxu0 0.0
        %873 = vmatprep.subr.mxu0 0.0
        %874 = vmatpush1.msra.mxu0 0.0
        %875 = vmatprep.subr.mxu0 0.0
        %876 = vmatpush1.msra.mxu0 0.0
        %877 = vmatprep.subr.mxu0 0.0
        %878 = vmatpush1.msra.mxu0 0.0
        %879 = vmatprep.subr.mxu0 0.0
        %880 = vmatpush1.msra.mxu0 0.0
        %881 = vmatprep.subr.mxu0 0.0
        %882 = vmatpush1.msra.mxu0 0.0
        %883 = vmatprep.subr.mxu0 0.0
        %884 = vmatpush1.msra.mxu0 0.0
        %885 = vmatprep.subr.mxu0 0.0
        %886 = vmatpush1.msra.mxu0 0.0
        %887 = vmatprep.mubr.f32.mxu0 0.0
        %v888 = vand.u32 %v652, 4294901760
        %v889 = vsub.f32 %v652, %v888
        %890 = vmatmul.mubr.f32.gmra.mrb[0].mxu0 %v889
        %v891 = vpop.f32.mrb[0].mxu0
        %v892 = vadd.f32 %v815, %v891
        %v893 = vpop.f32.mrb[0].mxu0
        %v894 = vadd.f32 %v817, %v893
        %895 = vdwg.mxu0
        %v896 = vand.u32 %v657, 4294901760
        %897 = vmatprep.subr.mxu0 %v896
        %v898 = vand.u32 %v655, 4294901760
        %899 = vmatpush1.msra.mxu0 %v898
        %900 = vmatprep.subr.mxu0 0.0
        %901 = vmatpush1.msra.mxu0 0.0
        %902 = vmatprep.subr.mxu0 0.0
        %903 = vmatpush1.msra.mxu0 0.0
        %904 = vmatprep.subr.mxu0 0.0
        %905 = vmatpush1.msra.mxu0 0.0
        %906 = vmatprep.subr.mxu0 0.0
        %907 = vmatpush1.msra.mxu0 0.0
        %908 = vmatprep.subr.mxu0 0.0
        %909 = vmatpush1.msra.mxu0 0.0
        %910 = vmatprep.subr.mxu0 0.0
        %911 = vmatpush1.msra.mxu0 0.0
        %912 = vmatprep.subr.mxu0 0.0
        %913 = vmatpush1.msra.mxu0 0.0
        %914 = vmatprep.subr.mxu0 0.0
        %915 = vmatpush1.msra.mxu0 0.0
        %916 = vmatprep.subr.mxu0 0.0
        %917 = vmatpush1.msra.mxu0 0.0
        %918 = vmatprep.subr.mxu0 0.0
        %919 = vmatpush1.msra.mxu0 0.0
        %920 = vmatprep.subr.mxu0 0.0
        %921 = vmatpush1.msra.mxu0 0.0
        %922 = vmatprep.subr.mxu0 0.0
        %923 = vmatpush1.msra.mxu0 0.0
        %924 = vmatprep.subr.mxu0 0.0
        %925 = vmatpush1.msra.mxu0 0.0
        %926 = vmatprep.subr.mxu0 0.0
        %927 = vmatpush1.msra.mxu0 0.0
        %928 = vmatprep.subr.mxu0 0.0
        %929 = vmatpush1.msra.mxu0 0.0
        %930 = vmatprep.subr.mxu0 0.0
        %931 = vmatpush1.msra.mxu0 0.0
        %932 = vmatprep.subr.mxu0 0.0
        %933 = vmatpush1.msra.mxu0 0.0
        %934 = vmatprep.subr.mxu0 0.0
        %935 = vmatpush1.msra.mxu0 0.0
        %936 = vmatprep.subr.mxu0 0.0
        %937 = vmatpush1.msra.mxu0 0.0
        %938 = vmatprep.subr.mxu0 0.0
        %939 = vmatpush1.msra.mxu0 0.0
        %940 = vmatprep.subr.mxu0 0.0
        %941 = vmatpush1.msra.mxu0 0.0
        %942 = vmatprep.subr.mxu0 0.0
        %943 = vmatpush1.msra.mxu0 0.0
        %944 = vmatprep.subr.mxu0 0.0
        %945 = vmatpush1.msra.mxu0 0.0
        %946 = vmatprep.subr.mxu0 0.0
        %947 = vmatpush1.msra.mxu0 0.0
        %948 = vmatprep.subr.mxu0 0.0
        %949 = vmatpush1.msra.mxu0 0.0
        %950 = vmatprep.subr.mxu0 0.0
        %951 = vmatpush1.msra.mxu0 0.0
        %952 = vmatprep.subr.mxu0 0.0
        %953 = vmatpush1.msra.mxu0 0.0
        %954 = vmatprep.subr.mxu0 0.0
        %955 = vmatpush1.msra.mxu0 0.0
        %956 = vmatprep.subr.mxu0 0.0
        %957 = vmatpush1.msra.mxu0 0.0
        %958 = vmatprep.subr.mxu0 0.0
        %959 = vmatpush1.msra.mxu0 0.0
        %960 = vmatprep.subr.mxu0 0.0
        %961 = vmatpush1.msra.mxu0 0.0
        %962 = vmatprep.mubr.f32.mxu0 0.0
        %v963 = vand.u32 %v652, 4294901760
        %v964 = vsub.f32 %v652, %v963
        %v965 = vand.u32 %v964, 4294901760
        %966 = vmatmul.mubr.f32.gmra.mrb[0].mxu0 %v965
        %v967 = vpop.f32.mrb[0].mxu0
        %v968 = vadd.f32 %v892, %v967
        %v969 = vpop.f32.mrb[0].mxu0
        %v970 = vadd.f32 %v894, %v969
        %971 = vdwg.mxu0
        %v972 = vand.u32 %v657, 4294901760
        %v973 = vsub.f32 %v657, %v972
        %v974 = vand.u32 %v973, 4294901760
        %975 = vmatprep.subr.mxu0 %v974
        %v976 = vand.u32 %v655, 4294901760
        %v977 = vsub.f32 %v655, %v976
        %v978 = vand.u32 %v977, 4294901760
        %979 = vmatpush1.msra.mxu0 %v978
        %980 = vmatprep.subr.mxu0 0.0
        %981 = vmatpush1.msra.mxu0 0.0
        %982 = vmatprep.subr.mxu0 0.0
        %983 = vmatpush1.msra.mxu0 0.0
        %984 = vmatprep.subr.mxu0 0.0
        %985 = vmatpush1.msra.mxu0 0.0
        %986 = vmatprep.subr.mxu0 0.0
        %987 = vmatpush1.msra.mxu0 0.0
        %988 = vmatprep.subr.mxu0 0.0
        %989 = vmatpush1.msra.mxu0 0.0
        %990 = vmatprep.subr.mxu0 0.0
        %991 = vmatpush1.msra.mxu0 0.0
        %992 = vmatprep.subr.mxu0 0.0
        %993 = vmatpush1.msra.mxu0 0.0
        %994 = vmatprep.subr.mxu0 0.0
        %995 = vmatpush1.msra.mxu0 0.0
        %996 = vmatprep.subr.mxu0 0.0
        %997 = vmatpush1.msra.mxu0 0.0
        %998 = vmatprep.subr.mxu0 0.0
        %999 = vmatpush1.msra.mxu0 0.0
        %1000 = vmatprep.subr.mxu0 0.0
        %1001 = vmatpush1.msra.mxu0 0.0
        %1002 = vmatprep.subr.mxu0 0.0
        %1003 = vmatpush1.msra.mxu0 0.0
        %1004 = vmatprep.subr.mxu0 0.0
        %1005 = vmatpush1.msra.mxu0 0.0
        %1006 = vmatprep.subr.mxu0 0.0
        %1007 = vmatpush1.msra.mxu0 0.0
        %1008 = vmatprep.subr.mxu0 0.0
        %1009 = vmatpush1.msra.mxu0 0.0
        %1010 = vmatprep.subr.mxu0 0.0
        %1011 = vmatpush1.msra.mxu0 0.0
        %1012 = vmatprep.subr.mxu0 0.0
        %1013 = vmatpush1.msra.mxu0 0.0
        %1014 = vmatprep.subr.mxu0 0.0
        %1015 = vmatpush1.msra.mxu0 0.0
        %1016 = vmatprep.subr.mxu0 0.0
        %1017 = vmatpush1.msra.mxu0 0.0
        %1018 = vmatprep.subr.mxu0 0.0
        %1019 = vmatpush1.msra.mxu0 0.0
        %1020 = vmatprep.subr.mxu0 0.0
        %1021 = vmatpush1.msra.mxu0 0.0
        %1022 = vmatprep.subr.mxu0 0.0
        %1023 = vmatpush1.msra.mxu0 0.0
        %1024 = vmatprep.subr.mxu0 0.0
        %1025 = vmatpush1.msra.mxu0 0.0
        %1026 = vmatprep.subr.mxu0 0.0
        %1027 = vmatpush1.msra.mxu0 0.0
        %1028 = vmatprep.subr.mxu0 0.0
        %1029 = vmatpush1.msra.mxu0 0.0
        %1030 = vmatprep.subr.mxu0 0.0
        %1031 = vmatpush1.msra.mxu0 0.0
        %1032 = vmatprep.subr.mxu0 0.0
        %1033 = vmatpush1.msra.mxu0 0.0
        %1034 = vmatprep.subr.mxu0 0.0
        %1035 = vmatpush1.msra.mxu0 0.0
        %1036 = vmatprep.subr.mxu0 0.0
        %1037 = vmatpush1.msra.mxu0 0.0
        %1038 = vmatprep.subr.mxu0 0.0
        %1039 = vmatpush1.msra.mxu0 0.0
        %1040 = vmatprep.subr.mxu0 0.0
        %1041 = vmatpush1.msra.mxu0 0.0
        %1042 = vmatprep.mubr.f32.mxu0 0.0
        %v1043 = vand.u32 %v652, 4294901760
        %1044 = vmatmul.mubr.f32.gmra.mrb[0].mxu0 %v1043
        %v1045 = vpop.f32.mrb[0].mxu0
        %v1046 = vadd.f32 %v968, %v1045
        %v1047 = vpop.f32.mrb[0].mxu0
        %v1048 = vadd.f32 %v970, %v1047
        %1049 = vdwg.mxu0
        %v1050 = vand.u32 %v657, 4294901760
        %1051 = vmatprep.subr.mxu0 %v1050
        %v1052 = vand.u32 %v655, 4294901760
        %1053 = vmatpush1.msra.mxu0 %v1052
        %1054 = vmatprep.subr.mxu0 0.0
        %1055 = vmatpush1.msra.mxu0 0.0
        %1056 = vmatprep.subr.mxu0 0.0
        %1057 = vmatpush1.msra.mxu0 0.0
        %1058 = vmatprep.subr.mxu0 0.0
        %1059 = vmatpush1.msra.mxu0 0.0
        %1060 = vmatprep.subr.mxu0 0.0
        %1061 = vmatpush1.msra.mxu0 0.0
        %1062 = vmatprep.subr.mxu0 0.0
        %1063 = vmatpush1.msra.mxu0 0.0
        %1064 = vmatprep.subr.mxu0 0.0
        %1065 = vmatpush1.msra.mxu0 0.0
        %1066 = vmatprep.subr.mxu0 0.0
        %1067 = vmatpush1.msra.mxu0 0.0
        %1068 = vmatprep.subr.mxu0 0.0
        %1069 = vmatpush1.msra.mxu0 0.0
        %1070 = vmatprep.subr.mxu0 0.0
        %1071 = vmatpush1.msra.mxu0 0.0
        %1072 = vmatprep.subr.mxu0 0.0
        %1073 = vmatpush1.msra.mxu0 0.0
        %1074 = vmatprep.subr.mxu0 0.0
        %1075 = vmatpush1.msra.mxu0 0.0
        %1076 = vmatprep.subr.mxu0 0.0
        %1077 = vmatpush1.msra.mxu0 0.0
        %1078 = vmatprep.subr.mxu0 0.0
        %1079 = vmatpush1.msra.mxu0 0.0
        %1080 = vmatprep.subr.mxu0 0.0
        %1081 = vmatpush1.msra.mxu0 0.0
        %1082 = vmatprep.subr.mxu0 0.0
        %1083 = vmatpush1.msra.mxu0 0.0
        %1084 = vmatprep.subr.mxu0 0.0
        %1085 = vmatpush1.msra.mxu0 0.0
        %1086 = vmatprep.subr.mxu0 0.0
        %1087 = vmatpush1.msra.mxu0 0.0
        %1088 = vmatprep.subr.mxu0 0.0
        %1089 = vmatpush1.msra.mxu0 0.0
        %1090 = vmatprep.subr.mxu0 0.0
        %1091 = vmatpush1.msra.mxu0 0.0
        %1092 = vmatprep.subr.mxu0 0.0
        %1093 = vmatpush1.msra.mxu0 0.0
        %1094 = vmatprep.subr.mxu0 0.0
        %1095 = vmatpush1.msra.mxu0 0.0
        %1096 = vmatprep.subr.mxu0 0.0
        %1097 = vmatpush1.msra.mxu0 0.0
        %1098 = vmatprep.subr.mxu0 0.0
        %1099 = vmatpush1.msra.mxu0 0.0
        %1100 = vmatprep.subr.mxu0 0.0
        %1101 = vmatpush1.msra.mxu0 0.0
        %1102 = vmatprep.subr.mxu0 0.0
        %1103 = vmatpush1.msra.mxu0 0.0
        %1104 = vmatprep.subr.mxu0 0.0
        %1105 = vmatpush1.msra.mxu0 0.0
        %1106 = vmatprep.subr.mxu0 0.0
        %1107 = vmatpush1.msra.mxu0 0.0
        %1108 = vmatprep.subr.mxu0 0.0
        %1109 = vmatpush1.msra.mxu0 0.0
        %1110 = vmatprep.subr.mxu0 0.0
        %1111 = vmatpush1.msra.mxu0 0.0
        %1112 = vmatprep.subr.mxu0 0.0
        %1113 = vmatpush1.msra.mxu0 0.0
        %1114 = vmatprep.subr.mxu0 0.0
        %1115 = vmatpush1.msra.mxu0 0.0
        %1116 = vmatprep.mubr.f32.mxu0 0.0
        %v1117 = vand.u32 %v652, 4294901760
        %1118 = vmatmul.mubr.f32.gmra.mrb[0].mxu0 %v1117
        %v1119 = vpop.f32.mrb[0].mxu0
        %v1120 = vadd.f32 %v1046, %v1119
        %v1121 = vpop.f32.mrb[0].mxu0
        %v1122 = vadd.f32 %v1048, %v1121
        %1123 = vdwg.mxu0
        %s1124 = sld [smem:[#allocation2]]
        %v1125 = vstv %s1124
        %v1126 = vmul.f32 %v1125, %v1120
        %v1127 = vmul.f32 %v1125, %v1122
        %v1128 = vadd.f32 %v1126, %v161
        %v1129 = vadd.f32 %v1127, %v163
        %v1132 = vcombine.low %v1128, %v1129
        %1134 = vst [vmem:[%s160] sm:$0xff] %v1132
        %s1135 = sand.u32 %s75, 1
        %s1136 = scalar_lea.sflag [#allocation5], %s1135
        %s1137 = sand.u32 %s75, 1
        %s1138 = smul.addr %s1137, 8
        %s1139 = scalar_lea.vmem [#allocation6], %s1138
        // Predicated region
        $region33: #{tpu_custom_call.1} parent=27 // pred_check
          %p1140 = pneg %p85
        $region34: #{tpu_custom_call.1} parent=27 // pred_check_branch
          %1142 = sbr.rel (%p1140) target = $region36
        $region35: #{tpu_custom_call.1} parent=27 // pred_region
          %s1144 = ssub.s32 128, 128
          %1145 = vsyncadd %s1136, %s1144
          %s1146 = smul.addr %s20, 2
          %s1147 = smul.addr %s1146, 64
          %s1148 = scalar_lea.hbm %s2, %s1147
          %s1150 = sshll.u32 %s1139, 4
          %s1151 = int_to_ptr.vmem [resolvable:$true] %s1150
          %1153 = dma.vmem_to_hbm [thread:$0]  %s1151, 128, %s1148, %s1136
        $region36: #{tpu_custom_call.1} parent=27 // pred_fallthru
          _
      $region28: #{tpu_custom_call.1} parent=5 // pred_fallthru
        _
      %p1154 = scmp.le.s32.totalorder 2, %s15
      // Predicated region
      $region37: #{tpu_custom_call.1} parent=5 // pred_check
        %p1155 = pneg %p1154
      $region38: #{tpu_custom_call.1} parent=5 // pred_check_branch
        %1157 = sbr.rel (%p1155) target = $region40
      $region39: #{tpu_custom_call.1} parent=5 // pred_region
        %s1158 = ssub.s32 %s15, 2
        // Predicated region
        $region41: #{tpu_custom_call.1} parent=39 // pred_check
          %p1159 = pneg %p91
        $region42: #{tpu_custom_call.1} parent=39 // pred_check_branch
          %1161 = sbr.rel (%p1159) target = $region44
        $region43: #{tpu_custom_call.1} parent=39 // pred_region
          %s1162 = sand.u32 %s76, 1
          %s1163 = scalar_lea.sflag [#allocation5], %s1162
          %s1164 = sand.u32 %s76, 1
          %s1165 = smul.addr %s1164, 8
          %s1166 = scalar_lea.vmem [#allocation6], %s1165
          %1167 = dma.done %s1163, 128
        $region44: #{tpu_custom_call.1} parent=39 // pred_fallthru
          _
      $region40: #{tpu_custom_call.1} parent=5 // pred_fallthru
        _
    $region6: #{tpu_custom_call.1} parent=1 // loop_footer
      %s19 = sadd.s32 1, %s15
    $region7: #{tpu_custom_call.1} parent=1 // loop_footer_branch
      %14 = sbr.rel target = $region3
    $region8: #{tpu_custom_call.1} parent=1 // loop_exit
      _
    %1168 = vsyncpa [#allocation4], 1
    %s1169 = scalar_lea.sflag [#allocation4], 1
    %1170 = vsyncpa %s1169, 1
    %1171 = vsyncpa [#allocation5], 1
    %s1172 = scalar_lea.sflag [#allocation5], 1
    %1173 = vsyncpa %s1172, 1

</llo_original>
